<compile_context>
chip_gen: v7x
topology: tpu7x:2x2x1
jax: 0.10.0
libtpu: 0.0.40
codegen_flags: <defaults>
</compile_context>

<pallas_src>
import jax
import jax.numpy as jnp
from jax.experimental import pallas as pl
from jax.experimental.pallas import tpu as pltpu

_EPS = 1e-5


# ----------------------------------------------------------------------------
# Single-pass kernel: each grid step owns the full (B, TC, HW) slab, so batch
# statistics are exact per channel block. Stats: XLU lane reduce + VPU; rsqrt on EUP.
# ----------------------------------------------------------------------------
def _cond_bn_kernel(gb_ref, x_ref, o_ref):
    i = pl.program_id(0)
    x = x_ref[...].astype(jnp.float32)                 # (B, TC, HW)
    b, tc, hw = x.shape
    n = b * hw

    # Two-pass mean/var (biased, eps=1e-5) == PyTorch BatchNorm2d training mode.
    s = jnp.sum(x, axis=2, keepdims=True)              # (B, TC, 1)   lane reduce
    mean = jnp.sum(s, axis=0, keepdims=True) / n       # (1, TC, 1)
    centered = x - mean
    sq = jnp.sum(centered * centered, axis=2, keepdims=True)
    var = jnp.sum(sq, axis=0, keepdims=True) / n       # (1, TC, 1)
    inv = jax.lax.rsqrt(var + _EPS)                    # EUP rsqrt (free slot)

    # gamma/beta slab is resident in VMEM (constant index_map); pick this step's
    # tile by dynamic leading-dim index.
    gb = gb_ref[i].astype(jnp.float32)                 # (B, TC, 2)
    gamma = gb[:, :, 0:1]                              # (B, TC, 1)
    beta = gb[:, :, 1:2]                               # (B, TC, 1)

    # Fold BN + affine into per-(B, TC) scale/shift -> 2 VALU ops per element.
    scale = gamma * inv
    shift = beta - mean * scale
    o_ref[...] = (x * scale + shift).astype(o_ref.dtype)


# ----------------------------------------------------------------------------
# Two-pass fallback kernels (large B*H*W): per-channel sum / sum-of-squares with a
# reduction grid axis over spatial tiles, then an elementwise apply kernel.
# ----------------------------------------------------------------------------
def _stats_kernel(x_ref, sums_ref):
    j = pl.program_id(1)

    @pl.when(j == 0)
    def _():
        sums_ref[...] = jnp.zeros_like(sums_ref)

    x = x_ref[...].astype(jnp.float32)                 # (B, TC, THW)
    s = jnp.sum(jnp.sum(x, axis=2, keepdims=True), axis=0)          # (TC, 1)
    sq = jnp.sum(jnp.sum(x * x, axis=2, keepdims=True), axis=0)     # (TC, 1)
    sums_ref[:, 0:1] += s
    sums_ref[:, 1:2] += sq


def _apply_kernel(ss_ref, x_ref, o_ref):
    x = x_ref[...].astype(jnp.float32)                 # (B, TC, THW)
    scale = ss_ref[:, :, 0:1].astype(jnp.float32)      # (B, TC, 1)
    shift = ss_ref[:, :, 1:2].astype(jnp.float32)      # (B, TC, 1)
    o_ref[...] = (x * scale + shift).astype(o_ref.dtype)


# ----------------------------------------------------------------------------
# Tiling / VMEM helpers
# ----------------------------------------------------------------------------
def _sublane_multiple(itemsize):
    # f32 -> 8, bf16 -> 16, int8/fp8 -> 32 (packed sublane rows)
    return max(8, 32 // itemsize)


def _vmem_limit_bytes(need_bytes):
    # Explicit scoped-VMEM limit sized from the chosen tiles: 2x headroom + slack,
    # clamped so it stays safe even on v7x's 64 MiB physical VMEM.
    return int(min(max(2 * need_bytes + (4 << 20), 8 << 20), 48 << 20))


def _auto_channel_tile(B, C, HW, itemsize, *, sublane_mult, min_grid_steps=4,
                       budget_bytes=12 << 20):
    """Largest channel tile such that:
       - tc is a (dtype-aware) sublane multiple and divides C,
       - double-buffered in + out blocks (~4 * B*tc*HW*itemsize) fit the budget
         (safe under v5e's 16 MiB default scoped VMEM),
       - the channel grid has >= min_grid_steps steps when possible (pipelining +
         megacore sharding on v7x).
       Returns None if even the minimum tile does not fit -> use two-pass path."""
    if C % sublane_mult != 0:
        if 4 * B * C * HW * itemsize <= budget_bytes:
            return C  # full-extent escape for small / odd channel counts
        return None
    cands = [tc for tc in range(sublane_mult, C + 1, sublane_mult) if C % tc == 0]
    fits = [tc for tc in cands if 4 * B * tc * HW * itemsize <= budget_bytes]
    if not fits:
        return None
    target = min(min_grid_steps, C // sublane_mult)
    good = [tc for tc in fits if C // tc >= target]
    return max(good) if good else min(fits)


# ----------------------------------------------------------------------------
# Wrappers
# ----------------------------------------------------------------------------
def _cond_bn_single_pass(x3, gamma, beta, *, B, C, HW, itemsize, channel_tile):
    num_tiles = C // channel_tile

    # Merge gamma/beta into one resident slab: (num_tiles, B, tc, 2).
    gb = jnp.stack([gamma, beta], axis=-1)                                   # (B, C, 2)
    gb4 = gb.reshape(B, num_tiles, channel_tile, 2).transpose(1, 0, 2, 3)    # (nt,B,tc,2)

    block_bytes = 4 * B * channel_tile * HW * itemsize           # 2x(in + out) buffers
    gb_bytes = 2 * num_tiles * B * ((channel_tile + 7) // 8 * 8) * 128 * 4
    elems = B * C * HW
    cost = pl.CostEstimate(
        flops=6 * elems,
        transcendentals=C,
        bytes_accessed=2 * elems * itemsize + 2 * B * C * 4,
    )

    out3 = pl.pallas_call(
        _cond_bn_kernel,
        out_shape=jax.ShapeDtypeStruct((B, C, HW), x3.dtype),
        grid=(num_tiles,),
        in_specs=[
            # Constant index_map -> fetched once, stays resident in VMEM.
            pl.BlockSpec((num_tiles, B, channel_tile, 2), lambda i: (0, 0, 0, 0)),
            pl.BlockSpec((B, channel_tile, HW), lambda i: (0, i, 0)),
        ],
        out_specs=pl.BlockSpec((B, channel_tile, HW), lambda i: (0, i, 0)),
        compiler_params=pltpu.CompilerParams(
            dimension_semantics=("parallel",),
            vmem_limit_bytes=_vmem_limit_bytes(block_bytes + gb_bytes),
        ),
        cost_estimate=cost,
    )(gb4, x3)
    return out3


def _cond_bn_two_pass(x3, gamma, beta, *, B, C, HW, itemsize, sublane_mult,
                      budget_bytes, channel_tile=None, hw_tile=None):
    if channel_tile is None:
        channel_tile = sublane_mult if C % sublane_mult == 0 else C
    assert C % channel_tile == 0
    assert channel_tile == C or channel_tile % 8 == 0

    if hw_tile is None:
        cands = [t for t in range(128, HW + 1, 128) if HW % t == 0] + [HW]
        fits = [t for t in cands if 4 * B * channel_tile * t * itemsize <= budget_bytes]
        hw_tile = max(fits) if fits else min(cands)
    assert HW % hw_tile == 0
    assert hw_tile == HW or hw_tile % 128 == 0

    n = B * HW
    grid = (C // channel_tile, HW // hw_tile)
    stats_bytes = 2 * B * channel_tile * hw_tile * itemsize

    # Pass 1: per-channel sum / sum of squares (reduction over the HW grid axis).
    sums = pl.pallas_call(
        _stats_kernel,
        out_shape=jax.ShapeDtypeStruct((C, 2), jnp.float32),
        grid=grid,
        in_specs=[pl.BlockSpec((B, channel_tile, hw_tile), lambda i, j: (0, i, j))],
        out_specs=pl.BlockSpec((channel_tile, 2), lambda i, j: (i, 0)),
        compiler_params=pltpu.CompilerParams(
            dimension_semantics=("parallel", "arbitrary"),
            vmem_limit_bytes=_vmem_limit_bytes(stats_bytes),
        ),
    )(x3)

    mean = sums[:, 0] / n                                        # (C,)
    var = jnp.maximum(sums[:, 1] / n - mean * mean, 0.0)         # biased variance
    inv = jax.lax.rsqrt(var + _EPS)                              # (C,)
    scale = gamma * inv[None, :]                                 # (B, C)
    shift = beta - mean[None, :] * scale                         # (B, C)
    ss = jnp.stack([scale, shift], axis=-1).astype(jnp.float32)  # (B, C, 2)

    apply_bytes = 4 * B * channel_tile * hw_tile * itemsize
    out3 = pl.pallas_call(
        _apply_kernel,
        out_shape=jax.ShapeDtypeStruct((B, C, HW), x3.dtype),
        grid=grid,
        in_specs=[
            pl.BlockSpec((B, channel_tile, 2), lambda i, j: (0, i, 0)),
            pl.BlockSpec((B, channel_tile, hw_tile), lambda i, j: (0, i, j)),
        ],
        out_specs=pl.BlockSpec((B, channel_tile, hw_tile), lambda i, j: (0, i, j)),
        compiler_params=pltpu.CompilerParams(
            dimension_semantics=("parallel", "parallel"),
            vmem_limit_bytes=_vmem_limit_bytes(apply_bytes),
        ),
    )(ss, x3)
    return out3


def conditional_batch_norm_2d(x, y, embed_weight, *, channel_tile=None, hw_tile=None,
                              force_two_pass=False, budget_bytes=12 << 20):
    """Forward of ConditionalBatchNorm2d (training-mode batch statistics).

    x: (B, C, H, W); y: (B,) int class ids; embed_weight: (num_classes, 2*C)
    where columns [:C] are gamma and [C:] are beta.
    """
    B, C, H, W = x.shape
    HW = H * W
    itemsize = jnp.dtype(x.dtype).itemsize
    sublane_mult = _sublane_multiple(itemsize)

    # Class-conditional affine params: tiny (B, 2C) gather done outside the kernel.
    emb = jnp.take(embed_weight, y, axis=0)          # (B, 2C)
    gamma = emb[:, :C]                               # (B, C)
    beta = emb[:, C:]                                # (B, C)

    x3 = x.reshape(B, C, HW)

    if channel_tile is None and not force_two_pass:
        channel_tile = _auto_channel_tile(B, C, HW, itemsize,
                                          sublane_mult=sublane_mult,
                                          budget_bytes=budget_bytes)

    if force_two_pass or channel_tile is None:
        out3 = _cond_bn_two_pass(x3, gamma, beta, B=B, C=C, HW=HW,
                                 itemsize=itemsize, sublane_mult=sublane_mult,
                                 budget_bytes=budget_bytes,
                                 channel_tile=channel_tile, hw_tile=hw_tile)
    else:
        assert C % channel_tile == 0
        assert channel_tile == C or channel_tile % 8 == 0
        out3 = _cond_bn_single_pass(x3, gamma, beta, B=B, C=C, HW=HW,
                                    itemsize=itemsize, channel_tile=channel_tile)
    return out3.reshape(B, C, H, W)


if __name__ == "__main__":
    key = jax.random.PRNGKey(0)
    k_x, k_y, k_g, k_b = jax.random.split(key, 4)

    batch, channels, height, width = 2, 32, 16, 16
    num_classes = 10

    # Embedding init per the module: gamma half ~ N(1, 0.02); the module zeros the
    # beta half, but we use small random betas so the beta path is actually tested.
    gamma_w = 1.0 + 0.02 * jax.random.normal(k_g, (num_classes, channels), jnp.float32)
    beta_w = 0.02 * jax.random.normal(k_b, (num_classes, channels), jnp.float32)
    embed_weight = jnp.concatenate([gamma_w, beta_w], axis=1)     # (num_classes, 2C)

    x = jax.random.normal(k_x, (batch, channels, height, width), jnp.float32)
    y = jax.random.randint(k_y, (batch,), 0, num_classes, jnp.int32)

    # Auto-tiled single-pass path (channel_tile=8 -> grid=(4,), pipelined/parallel).
    out = jax.block_until_ready(conditional_batch_norm_2d(x, y, embed_weight))
    # Explicit larger channel tile (grid=(2,)).
    out_tiled = jax.block_until_ready(
        conditional_batch_norm_2d(x, y, embed_weight, channel_tile=16))
    # Two-pass fallback path exercised at small shapes (stats + apply kernels).
    out_2pass = jax.block_until_ready(
        conditional_batch_norm_2d(x, y, embed_weight, force_two_pass=True,
                                  channel_tile=8, hw_tile=128))

    # Pure-JAX reference matching PyTorch: BatchNorm2d training mode (biased var,
    # eps=1e-5) followed by the class-conditional affine.
    mean = jnp.mean(x, axis=(0, 2, 3), keepdims=True)
    var = jnp.mean((x - mean) ** 2, axis=(0, 2, 3), keepdims=True)
    xn = (x - mean) / jnp.sqrt(var + _EPS)
    emb = embed_weight[y]
    g = emb[:, :channels][:, :, None, None]
    b = emb[:, channels:][:, :, None, None]
    ref = g * xn + b

    assert out.shape == x.shape
    assert jnp.allclose(out, ref, atol=1e-4, rtol=1e-5)
    assert jnp.allclose(out_tiled, ref, atol=1e-4, rtol=1e-5)
    assert jnp.allclose(out_2pass, ref, atol=1e-4, rtol=1e-5)

    print("KERNEL_OK")
</pallas_src>

<mosaic_0001>
module attributes {stable_mosaic.version = 11 : i64} {
  func.func @_cond_bn_kernel(%arg0: i32, %arg1: memref<4x2x8x2xf32, #tpu.memory_space<vmem>>, %arg2: memref<2x8x256xf32, #tpu.memory_space<vmem>>, %arg3: memref<2x8x256xf32, #tpu.memory_space<vmem>>) attributes {dimension_semantics = [#tpu.dimension_semantics<parallel>], iteration_bounds = array<i64: 4>, scalar_prefetch = 0 : i64, scratch_operands = 0 : i64, tpu.core_type = #tpu.core_type<tc>, window_params = [{pipeline_mode = #tpu.pipeline_mode<synchronous>, transform_indices = @transform_0, window_bounds = array<i64: 4, 2, 8, 2>}, {transform_indices = @transform_1, window_bounds = array<i64: 2, 8, 256>}, {transform_indices = @transform_2, window_bounds = array<i64: 2, 8, 256>}]} {
    %c0 = arith.constant 0 : index
    %c0_0 = arith.constant 0 : index
    %c0_1 = arith.constant 0 : index
    %0 = vector.load %arg2[%c0, %c0_0, %c0_1] : memref<2x8x256xf32, #tpu.memory_space<vmem>>, vector<2x8x256xf32>
    %cst = arith.constant dense<0.000000e+00> : vector<2x8xf32>
    %1 = vector.multi_reduction <add>, %0, %cst [2] : vector<2x8x256xf32> to vector<2x8xf32>
    %2 = vector.shape_cast %1 : vector<2x8xf32> to vector<2x8x1xf32>
    %cst_2 = arith.constant dense<0.000000e+00> : vector<8x1xf32>
    %3 = vector.multi_reduction <add>, %2, %cst_2 [0] : vector<2x8x1xf32> to vector<8x1xf32>
    %4 = vector.shape_cast %3 : vector<8x1xf32> to vector<1x8x1xf32>
    %cst_3 = arith.constant 5.120000e+02 : f32
    %5 = vector.broadcast %cst_3 : f32 to vector<1x8x1xf32>
    %6 = arith.divf %4, %5 : vector<1x8x1xf32>
    %7 = vector.broadcast %6 : vector<1x8x1xf32> to vector<2x8x256xf32>
    %8 = arith.subf %0, %7 : vector<2x8x256xf32>
    %9 = arith.mulf %8, %8 : vector<2x8x256xf32>
    %cst_4 = arith.constant dense<0.000000e+00> : vector<2x8xf32>
    %10 = vector.multi_reduction <add>, %9, %cst_4 [2] : vector<2x8x256xf32> to vector<2x8xf32>
    %11 = vector.shape_cast %10 : vector<2x8xf32> to vector<2x8x1xf32>
    %cst_5 = arith.constant dense<0.000000e+00> : vector<8x1xf32>
    %12 = vector.multi_reduction <add>, %11, %cst_5 [0] : vector<2x8x1xf32> to vector<8x1xf32>
    %13 = vector.shape_cast %12 : vector<8x1xf32> to vector<1x8x1xf32>
    %cst_6 = arith.constant 5.120000e+02 : f32
    %14 = vector.broadcast %cst_6 : f32 to vector<1x8x1xf32>
    %15 = arith.divf %13, %14 : vector<1x8x1xf32>
    %cst_7 = arith.constant 9.99999974E-6 : f32
    %16 = vector.broadcast %cst_7 : f32 to vector<1x8x1xf32>
    %17 = arith.addf %15, %16 : vector<1x8x1xf32>
    %18 = math.rsqrt %17 : vector<1x8x1xf32>
    %19 = arith.index_cast %arg0 : i32 to index
    %c0_8 = arith.constant 0 : index
    %c0_9 = arith.constant 0 : index
    %c0_10 = arith.constant 0 : index
    %20 = vector.load %arg1[%19, %c0_8, %c0_9, %c0_10] : memref<4x2x8x2xf32, #tpu.memory_space<vmem>>, vector<1x2x8x2xf32>
    %21 = vector.shape_cast %20 : vector<1x2x8x2xf32> to vector<2x8x2xf32>
    %22 = vector.extract_strided_slice %21 {offsets = [0, 0, 0], sizes = [2, 8, 1], strides = [1, 1, 1]} : vector<2x8x2xf32> to vector<2x8x1xf32>
    %23 = vector.extract_strided_slice %21 {offsets = [0, 0, 1], sizes = [2, 8, 1], strides = [1, 1, 1]} : vector<2x8x2xf32> to vector<2x8x1xf32>
    %24 = vector.broadcast %18 : vector<1x8x1xf32> to vector<2x8x1xf32>
    %25 = arith.mulf %22, %24 : vector<2x8x1xf32>
    %26 = vector.broadcast %6 : vector<1x8x1xf32> to vector<2x8x1xf32>
    %27 = arith.mulf %26, %25 : vector<2x8x1xf32>
    %28 = arith.subf %23, %27 : vector<2x8x1xf32>
    %29 = vector.broadcast %25 : vector<2x8x1xf32> to vector<2x8x256xf32>
    %30 = arith.mulf %0, %29 : vector<2x8x256xf32>
    %31 = vector.broadcast %28 : vector<2x8x1xf32> to vector<2x8x256xf32>
    %32 = arith.addf %30, %31 : vector<2x8x256xf32>
    %c0_11 = arith.constant 0 : index
    %c0_12 = arith.constant 0 : index
    %c0_13 = arith.constant 0 : index
    %33 = vector.load %arg3[%c0_11, %c0_12, %c0_13] : memref<2x8x256xf32, #tpu.memory_space<vmem>>, vector<2x8x256xf32>
    tpu.vector_store %arg3[%c0_11, %c0_12, %c0_13], %32 {strides = array<i32>} : memref<2x8x256xf32, #tpu.memory_space<vmem>>, vector<2x8x256xf32>,
    return
  }
  func.func @transform_0(%arg0: i32) -> (i32, i32, i32, i32) {
    %c0_i32 = arith.constant 0 : i32
    %c0_i32_0 = arith.constant 0 : i32
    %c0_i32_1 = arith.constant 0 : i32
    %c0_i32_2 = arith.constant 0 : i32
    %c0_i32_3 = arith.constant 0 : i32
    return %c0_i32, %c0_i32_0, %c0_i32_1, %c0_i32_2 : i32, i32, i32, i32
  }
  func.func @transform_1(%arg0: i32) -> (i32, i32, i32) {
    %c0_i32 = arith.constant 0 : i32
    %c0_i32_0 = arith.constant 0 : i32
    %c0_i32_1 = arith.constant 0 : i32
    return %c0_i32, %arg0, %c0_i32_0 : i32, i32, i32
  }
  func.func @transform_2(%arg0: i32) -> (i32, i32, i32) {
    %c0_i32 = arith.constant 0 : i32
    %c0_i32_0 = arith.constant 0 : i32
    %c0_i32_1 = arith.constant 0 : i32
    return %c0_i32, %arg0, %c0_i32_0 : i32, i32, i32
  }
}

</mosaic_0001>

<llo_original>
// kernel: tpu_custom_call.1
$region0: #{tpu_custom_call.1}
  #allocation0 [shape = 'u32[]', space=smem, size = 0x4, offset = 0x4, fixed_abs, tag = 'smem constant byte address 0x4 - core index']
  #allocation1 [shape = 'u32[144,128]{1,0:T(1,128)}', space=vmem, size = 0x12000, scoped, tag = 'internal scratch']
  %s0 = inlined_call_operand.vmem [shape: f32[4,2,8,2], index: 0, kind: input, shape index: {}]
  %s1 = inlined_call_operand.hbm [shape: f32[2,32,256], index: 1, kind: input, shape index: {}]
  %s2 = inlined_call_operand.hbm [shape: f32[2,32,256], index: 2, kind: output, shape index: {}]
  %s3 = sld [smem:[#allocation0]]
  $region45: #{tpu_custom_call.1} parent=0
    _
  %s5 = ssub.s32 1, %s3
  %s6 = scalar_select 0, %s5, %s3
  $region1: #{tpu_custom_call.1} parent=0
    #allocation2 [shape = 'u8[32768]{0}', space=vmem, size = 0x8000, scoped, tag = 'input window, operand 1']
    #allocation3 [shape = 's32[2]{0}', space=sflag, size = 0x8, scoped, tag = 'scoped memory for tpu_custom_call.1']
    #allocation4 [shape = 's32[2]{0}', space=sflag, size = 0x8, scoped, tag = 'scoped memory for tpu_custom_call.1']
    #allocation5 [shape = 'u8[32768]{0}', space=vmem, size = 0x8000, scoped, tag = 'output window, operand 0']
    %7 = vsyncpa [#allocation3], 0
    %s8 = scalar_lea.sflag [#allocation3], 1
    %9 = vsyncpa %s8, 0
    %10 = vsyncpa [#allocation4], 0
    %s11 = scalar_lea.sflag [#allocation4], 1
    %12 = vsyncpa %s11, 0
    loop: start=0, step=1, limit=6
    $region2: #{tpu_custom_call.1} parent=1 // loop_pre_header
      _
    $region3: #{tpu_custom_call.1} parent=1 // loop_header
      %s14 = sphi 0, %s18
      %p15 = scmp.ge.s32.totalorder %s14, 6
      %s22 = sphi 0, %s22
      %s24 = sphi 0, %s22
      %s25 = sphi 0, %s24
      %s39 = sphi 0, %s25
      %s45 = sphi 0, %s47
      %s48 = sphi 0, %s45
      %s49 = sphi 0, %s48
      %s65 = sphi 0, %s49
      %s71 = sphi 0, %s73
      %s74 = sphi 0, %s71
      %s75 = sphi 0, %s74
      %s91 = sphi 0, %s75
    $region4: #{tpu_custom_call.1} parent=1 // loop_header_branch
      %17 = sbr.rel (%p15) target = $region8
    $region5: #{tpu_custom_call.1} parent=1 // loop_body
      %s19 = ssub.s32 %s14, 1
      %s20 = ssub.s32 %s14, 2
      %s21 = sadd.s32 %s14, 1
      %s23 = sadd.s32 %s22, 1
      %p26 = scmp.eq.s32.totalorder %s14, 3
      %p27 = scmp.ne.s32.totalorder %s22, %s24
      %p28 = scmp.eq.s32.totalorder %s14, 0
      %p29 = por %p27, %p28
      %p30 = scmp.ne.s32.totalorder %s22, %s24
      %p31 = scmp.eq.s32.totalorder %s19, 3
      %p32 = por %p30, %p31
      %p33 = scmp.ne.s32.totalorder %s24, %s25
      %p34 = scmp.eq.s32.totalorder %s19, 0
      %p35 = por %p33, %p34
      %p36 = scmp.ne.s32.totalorder %s24, %s25
      %p37 = scmp.eq.s32.totalorder %s20, 3
      %p38 = por %p36, %p37
      %p40 = scmp.ne.s32.totalorder %s25, %s39
      %p41 = scmp.eq.s32.totalorder %s20, 0
      %p42 = por %p40, %p41
      %s43 = ssub.s32 %s14, %s21
      %p44 = scmp.eq.s32.totalorder %s43, 0
      %s46 = sadd.s32 %s45, 1
      %s47 = scalar_select %p44, %s45, %s46
      %p50 = pneg %p44
      %p51 = scmp.eq.s32.totalorder %s14, 3
      %p52 = por %p50, %p51
      %p53 = scmp.ne.s32.totalorder %s45, %s48
      %p54 = scmp.eq.s32.totalorder %s14, 0
      %p55 = por %p53, %p54
      %p56 = scmp.ne.s32.totalorder %s45, %s48
      %p57 = scmp.eq.s32.totalorder %s19, 3
      %p58 = por %p56, %p57
      %p59 = scmp.ne.s32.totalorder %s48, %s49
      %p60 = scmp.eq.s32.totalorder %s19, 0
      %p61 = por %p59, %p60
      %p62 = scmp.ne.s32.totalorder %s48, %s49
      %p63 = scmp.eq.s32.totalorder %s20, 3
      %p64 = por %p62, %p63
      %p66 = scmp.ne.s32.totalorder %s49, %s65
      %p67 = scmp.eq.s32.totalorder %s20, 0
      %p68 = por %p66, %p67
      %s69 = ssub.s32 %s14, %s21
      %p70 = scmp.eq.s32.totalorder %s69, 0
      %s72 = sadd.s32 %s71, 1
      %s73 = scalar_select %p70, %s71, %s72
      %p76 = pneg %p70
      %p77 = scmp.eq.s32.totalorder %s14, 3
      %p78 = por %p76, %p77
      %p79 = scmp.ne.s32.totalorder %s71, %s74
      %p80 = scmp.eq.s32.totalorder %s14, 0
      %p81 = por %p79, %p80
      %p82 = scmp.ne.s32.totalorder %s71, %s74
      %p83 = scmp.eq.s32.totalorder %s19, 3
      %p84 = por %p82, %p83
      %p85 = scmp.ne.s32.totalorder %s74, %s75
      %p86 = scmp.eq.s32.totalorder %s19, 0
      %p87 = por %p85, %p86
      %p88 = scmp.ne.s32.totalorder %s74, %s75
      %p89 = scmp.eq.s32.totalorder %s20, 3
      %p90 = por %p88, %p89
      %p92 = scmp.ne.s32.totalorder %s75, %s91
      %p93 = scmp.eq.s32.totalorder %s20, 0
      %p94 = por %p92, %p93
      %p95 = scmp.le.s32.totalorder 1, %s14
      %p96 = scmp.lt.s32.totalorder %s14, 5
      %p97 = pnand %p95, %p96
      %p98 = pneg %p97
      // Predicated region
      $region9: #{tpu_custom_call.1} parent=5 // pred_check
        _
      $region10: #{tpu_custom_call.1} parent=5 // pred_check_branch
        %100 = sbr.rel (%p97) target = $region12
      $region11: #{tpu_custom_call.1} parent=5 // pred_region
        %s101 = ssub.s32 %s14, 1
        // Predicated region
        $region13: #{tpu_custom_call.1} parent=11 // pred_check
          %p102 = pneg %p35
        $region14: #{tpu_custom_call.1} parent=11 // pred_check_branch
          %104 = sbr.rel (%p102) target = $region16
        $region15: #{tpu_custom_call.1} parent=11 // pred_region
          _
        $region16: #{tpu_custom_call.1} parent=11 // pred_fallthru
          _
      $region12: #{tpu_custom_call.1} parent=5 // pred_fallthru
        _
      %p105 = scmp.lt.s32.totalorder %s14, 4
      // Predicated region
      $region17: #{tpu_custom_call.1} parent=5 // pred_check
        %p106 = pneg %p105
      $region18: #{tpu_custom_call.1} parent=5 // pred_check_branch
        %108 = sbr.rel (%p106) target = $region20
      $region19: #{tpu_custom_call.1} parent=5 // pred_region
        // Predicated region
        $region21: #{tpu_custom_call.1} parent=19 // pred_check
          %p109 = pneg %p55
        $region22: #{tpu_custom_call.1} parent=19 // pred_check_branch
          %111 = sbr.rel (%p109) target = $region24
        $region23: #{tpu_custom_call.1} parent=19 // pred_region
          %s112 = sand.u32 %s45, 1
          %s113 = scalar_lea.sflag [#allocation3], %s112
          %s114 = sand.u32 %s45, 1
          %s115 = smul.addr %s114, 32
          %s116 = scalar_lea.vmem [#allocation2], %s115
          %s118 = ssub.s32 512, 512
          %119 = vsyncadd %s113, %s118
          %s120 = smul.addr %s14, 2
          %s121 = smul.addr %s120, 128
          %s122 = scalar_lea.hbm %s1, %s121
          %s123 = sshll.u32 %s116, 4
          %s124 = int_to_ptr.vmem [resolvable:$true] %s123
          %129 = dma.hbm_to_vmem [thread:$0]  %s122, 512, %s124, %s113, 1024, 256, 16
        $region24: #{tpu_custom_call.1} parent=19 // pred_fallthru
          _
      $region20: #{tpu_custom_call.1} parent=5 // pred_fallthru
        _
      %p130 = scmp.le.s32.totalorder 1, %s14
      %p131 = scmp.lt.s32.totalorder %s14, 5
      %p132 = pnand %p130, %p131
      %p133 = pneg %p132
      // Predicated region
      $region25: #{tpu_custom_call.1} parent=5 // pred_check
        _
      $region26: #{tpu_custom_call.1} parent=5 // pred_check_branch
        %135 = sbr.rel (%p132) target = $region28
      $region27: #{tpu_custom_call.1} parent=5 // pred_region
        %s136 = ssub.s32 %s14, 1
        %s137 = sand.u32 %s48, 1
        %s138 = scalar_lea.sflag [#allocation3], %s137
        %s139 = sand.u32 %s48, 1
        %s140 = smul.addr %s139, 32
        %s141 = scalar_lea.vmem [#allocation2], %s140
        // Predicated region
        $region29: #{tpu_custom_call.1} parent=27 // pred_check
          %p142 = pneg %p61
        $region30: #{tpu_custom_call.1} parent=27 // pred_check_branch
          %144 = sbr.rel (%p142) target = $region32
        $region31: #{tpu_custom_call.1} parent=27 // pred_region
          %145 = dma.done %s138, 512
        $region32: #{tpu_custom_call.1} parent=27 // pred_fallthru
          _
        %p146 = pneg %p35
        %p147 = pneg %p32
        %s148 = sand.u32 %s48, 1
        %s149 = scalar_lea.sflag [#allocation3], %s148
        %s150 = sand.u32 %s48, 1
        %s151 = smul.addr %s150, 32
        %s152 = scalar_lea.vmem [#allocation2], %s151
        %p153 = pneg %p61
        %p154 = pneg %p58
        %p155 = pneg %p87
        %p156 = pneg %p84
        %s157 = sand.u32 %s74, 1
        %s158 = scalar_lea.sflag [#allocation4], %s157
        %s159 = sand.u32 %s74, 1
        %s160 = smul.addr %s159, 32
        %s161 = scalar_lea.vmem [#allocation5], %s160
        %v162 = vld [vmem:[%s141] sm:$0xff]
        %v163 = vld [vmem:[%s141 + $0x8] sm:$0xff]
        %v164 = vld [vmem:[%s141 + $0x10] sm:$0xff]
        %v165 = vld [vmem:[%s141 + $0x18] sm:$0xff]
        %v166 = vadd.f32 %v162, %v163
        %167 = vadd.xlane.f32.xlu0 %v166
        %v168 = vpop.xlane.xlu0 %167
        %v169 = vadd.f32 %v164, %v165
        %170 = vadd.xlane.f32.xlu0 %v169
        %v171 = vpop.xlane.xlu0 %170
        %v172 = vadd.f32 %v168, %v171
        %v173 = vrcp.pop 512.0
        %v174 = vmul.f32 %v172, %v173
        %v175 = vsub.f32 %v162, %v174
        %v176 = vsub.f32 %v163, %v174
        %v177 = vsub.f32 %v164, %v174
        %v178 = vsub.f32 %v165, %v174
        %v179 = vmul.f32 %v175, %v175
        %v180 = vmul.f32 %v176, %v176
        %v181 = vmul.f32 %v177, %v177
        %v182 = vmul.f32 %v178, %v178
        %v183 = vadd.f32 %v179, %v180
        %184 = vadd.xlane.f32.xlu0 %v183
        %v185 = vpop.xlane.xlu0 %184
        %v186 = vadd.f32 %v181, %v182
        %187 = vadd.xlane.f32.xlu0 %v186
        %v188 = vpop.xlane.xlu0 %187
        %v189 = vadd.f32 %v185, %v188
        %v190 = vmul.f32 %v189, %v173
        %v191 = vadd.f32 %v190, 1e-05
        %v192 = vrsqrt.pop %v191
        %s193 = smul.u32 %s19, 16
        %s194 = scalar_lea.vmem %s0, %s193
        %v195 = vld [vmem:[%s194] sm:$0xff]
        %v196 = vld [vmem:[%s194 + $0x8] sm:$0xff]
        %v197 = vmul.f32 %v195, %v192
        %v198 = vmul.f32 %v196, %v192
        %v199 = vmul.f32 %v174, %v197
        %v200 = vmul.f32 %v174, %v198
        %203 = vrot.lane.b32.xlu0 %v199, 1
        %v204 = vpop.permute.xlu0 %203
        %205 = vrot.lane.b32.xlu0 %v200, 1
        %v206 = vpop.permute.xlu0 %205
        %v209 = vsub.f32 %v195, %v204
        %v210 = vsub.f32 %v196, %v206
        %212 = vset.pattern.permute.xlu0 0
        %213 = vperm.xlu0 %212, %v197
        %v214 = vpop.permute.xlu0 %213
        %217 = vset.pattern.permute.xlu0 0
        %218 = vperm.xlu0 %217, %v198
        %v219 = vpop.permute.xlu0 %218
        %v221 = vmul.f32 %v162, %v214
        %v222 = vmul.f32 %v163, %v214
        %v223 = vmul.f32 %v164, %v219
        %v224 = vmul.f32 %v165, %v219
        %226 = vset.pattern.permute.xlu0 1
        %227 = vperm.xlu0 %226, %v209
        %v228 = vpop.permute.xlu0 %227
        %231 = vset.pattern.permute.xlu0 1
        %232 = vperm.xlu0 %231, %v210
        %v233 = vpop.permute.xlu0 %232
        %v235 = vadd.f32 %v221, %v228
        %v236 = vadd.f32 %v222, %v228
        %v237 = vadd.f32 %v223, %v233
        %v238 = vadd.f32 %v224, %v233
        %239 = vst [vmem:[%s161] sm:$0xff] %v235
        %240 = vst [vmem:[%s161 + $0x8] sm:$0xff] %v236
        %241 = vst [vmem:[%s161 + $0x10] sm:$0xff] %v237
        %242 = vst [vmem:[%s161 + $0x18] sm:$0xff] %v238
        %s243 = sand.u32 %s74, 1
        %s244 = scalar_lea.sflag [#allocation4], %s243
        %s245 = sand.u32 %s74, 1
        %s246 = smul.addr %s245, 32
        %s247 = scalar_lea.vmem [#allocation5], %s246
        // Predicated region
        $region33: #{tpu_custom_call.1} parent=27 // pred_check
          %p248 = pneg %p84
        $region34: #{tpu_custom_call.1} parent=27 // pred_check_branch
          %250 = sbr.rel (%p248) target = $region36
        $region35: #{tpu_custom_call.1} parent=27 // pred_region
          %s252 = ssub.s32 512, 512
          %253 = vsyncadd %s244, %s252
          %s254 = smul.addr %s19, 2
          %s255 = smul.addr %s254, 128
          %s256 = scalar_lea.hbm %s2, %s255
          %s257 = sshll.u32 %s247, 4
          %s258 = int_to_ptr.vmem [resolvable:$true] %s257
          %263 = dma.vmem_to_hbm [thread:$0]  %s258, 512, %s256, %s244, 256, 1024, 16
        $region36: #{tpu_custom_call.1} parent=27 // pred_fallthru
          _
      $region28: #{tpu_custom_call.1} parent=5 // pred_fallthru
        _
      %p264 = scmp.le.s32.totalorder 2, %s14
      // Predicated region
      $region37: #{tpu_custom_call.1} parent=5 // pred_check
        %p265 = pneg %p264
      $region38: #{tpu_custom_call.1} parent=5 // pred_check_branch
        %267 = sbr.rel (%p265) target = $region40
      $region39: #{tpu_custom_call.1} parent=5 // pred_region
        %s268 = ssub.s32 %s14, 2
        // Predicated region
        $region41: #{tpu_custom_call.1} parent=39 // pred_check
          %p269 = pneg %p90
        $region42: #{tpu_custom_call.1} parent=39 // pred_check_branch
          %271 = sbr.rel (%p269) target = $region44
        $region43: #{tpu_custom_call.1} parent=39 // pred_region
          %s272 = sand.u32 %s75, 1
          %s273 = scalar_lea.sflag [#allocation4], %s272
          %s274 = sand.u32 %s75, 1
          %s275 = smul.addr %s274, 32
          %s276 = scalar_lea.vmem [#allocation5], %s275
          %277 = dma.done %s273, 512
        $region44: #{tpu_custom_call.1} parent=39 // pred_fallthru
          _
      $region40: #{tpu_custom_call.1} parent=5 // pred_fallthru
        _
    $region6: #{tpu_custom_call.1} parent=1 // loop_footer
      %s18 = sadd.s32 1, %s14
    $region7: #{tpu_custom_call.1} parent=1 // loop_footer_branch
      %13 = sbr.rel target = $region3
    $region8: #{tpu_custom_call.1} parent=1 // loop_exit
      _
    %278 = vsyncpa [#allocation3], 1
    %s279 = scalar_lea.sflag [#allocation3], 1
    %280 = vsyncpa %s279, 1
    %281 = vsyncpa [#allocation4], 1
    %s282 = scalar_lea.sflag [#allocation4], 1
    %283 = vsyncpa %s282, 1

</llo_original>
